<compile_context>
chip_gen: v5e
topology: v5e:2x2
jax: 0.10.0
libtpu: 0.0.40
codegen_flags: <defaults>
</compile_context>

<pallas_src>
import math

import jax
import jax.numpy as jnp
from jax.experimental import pallas as pl
from jax.experimental.pallas import tpu as pltpu


def _cdiv(a, b):
    return -(-a // b)


def _round_up(a, b):
    return _cdiv(a, b) * b


def _layer_scale_kernel(x_ref, scale_ref, o_ref):
    # x_ref:     (tile_rows, tl) input tile
    # scale_ref: (1, tl) float32 scale row, broadcast over sublanes
    # o_ref:     (tile_rows, tl) output tile
    o_ref[...] = (x_ref[...] * scale_ref[...]).astype(o_ref.dtype)


def layer_scale_forward(x, layer_scale):
    """y = x * layer_scale with the scale broadcast over leading axes."""
    orig_shape = x.shape
    C = orig_shape[-1]
    total = math.prod(orig_shape)
    itemsize = jnp.dtype(x.dtype).itemsize
    # dtype-native sublane multiple: f32 -> 8, bf16 -> 16, int8/fp8 -> 32
    sub_mult = {4: 8, 2: 16, 1: 32}.get(itemsize, 8)

    scale_f32 = jnp.reshape(layer_scale, (C,)).astype(jnp.float32)

    # ---- per-generation VMEM budget / block-size target -------------------
    try:
        phys_vmem = int(pltpu.get_tpu_info().vmem_capacity_bytes)
    except Exception:
        phys_vmem = 64 * 1024 * 1024  # conservative fallback (v7x per-TC)
    vmem_limit = (phys_vmem * 3) // 4  # 96 MiB on 128 MiB chips, 48 MiB on v7x
    # Live footprint ~= 4x tile (double-buffered in + out) + tiny scale row.
    target_block_bytes = max(2 << 20, min(16 << 20, vmem_limit // 5))

    # ---- lane-dense last dim L (always a multiple of 128) -----------------
    if C % 128 == 0:
        L = C
    else:
        lcm = (C * 128) // math.gcd(C, 128)
        if lcm <= max(total, 128):
            L = lcm                      # scale pattern repeats L//C times/row
        else:
            L = _round_up(total, 128)    # tiny tensor: one padded row
    # Channel index of flattened position p is p % C; every row starts at
    # channel 0 (L % C == 0 in the multi-row cases), so one tiled row works.
    scale_row = jnp.tile(scale_f32, _cdiv(L, C))[:L].reshape(1, L)

    pad = (-total) % L
    x_flat = x.reshape(-1)
    if pad:
        x_flat = jnp.concatenate([x_flat, jnp.zeros((pad,), dtype=x.dtype)])
    n_rows = (total + pad) // L
    x2d = x_flat.reshape(n_rows, L)

    # ---- lane split for very large C (keeps v7x's 64 MiB VMEM safe) -------
    if L * sub_mult * itemsize > target_block_bytes:
        tl = max(128, (target_block_bytes // (sub_mult * itemsize)) // 128 * 128)
    else:
        tl = L
    n_lane_tiles = _cdiv(L, tl)

    # ---- row tile: as big as the per-block budget allows ------------------
    tile_rows = max(
        sub_mult,
        (target_block_bytes // (tl * itemsize)) // sub_mult * sub_mult,
    )

    # Keep >= ~8 grid steps on big inputs so v7x's two TensorCores both get
    # work (the "parallel" grid axes are sharded across cores).
    min_steps = 8
    row_steps_wanted = _cdiv(min_steps, n_lane_tiles)
    if row_steps_wanted > 1 and n_rows >= row_steps_wanted * sub_mult:
        cap = _round_up(_cdiv(n_rows, row_steps_wanted), sub_mult)
        tile_rows = min(tile_rows, max(sub_mult, cap))

    if tile_rows >= n_rows:
        tile_rows = n_rows  # full-extent block is always layout-legal

    grid = (_cdiv(n_rows, tile_rows), n_lane_tiles)

    cost = pl.CostEstimate(
        flops=total,
        transcendentals=0,
        bytes_accessed=2 * total * itemsize + L * 4,
    )

    out2d = pl.pallas_call(
        _layer_scale_kernel,
        out_shape=jax.ShapeDtypeStruct((n_rows, L), x.dtype),
        grid_spec=pltpu.PrefetchScalarGridSpec(
            num_scalar_prefetch=0,
            grid=grid,
            in_specs=[
                # row/lane tiled input slab
                pl.BlockSpec((tile_rows, tl), lambda i, j: (i, j)),
                # scale row: constant over the row axis -> resident per lane tile
                pl.BlockSpec((1, tl), lambda i, j: (0, j)),
            ],
            out_specs=pl.BlockSpec((tile_rows, tl), lambda i, j: (i, j)),
        ),
        compiler_params=pltpu.CompilerParams(
            dimension_semantics=("parallel", "parallel"),
            vmem_limit_bytes=int(vmem_limit),
        ),
        cost_estimate=cost,
    )(x2d, scale_row)

    out_flat = out2d.reshape(-1)
    if pad:
        out_flat = out_flat[:total]
    return out_flat.reshape(orig_shape)


if __name__ == "__main__":
    LAYER_SCALE_INIT = 1e-05
    key = jax.random.PRNGKey(0)
    k0, k1 = jax.random.split(key)

    # dims=3 module: layer_scale shape (1, 1, C), x shape (B, T, C).
    B, T, C = 2, 8, 32
    x = jax.random.normal(k0, (B, T, C), dtype=jnp.float32)
    layer_scale = jnp.ones((1, 1, C), dtype=jnp.float32) * LAYER_SCALE_INIT

    y = jax.block_until_ready(layer_scale_forward(x, layer_scale))
    y_ref = x * layer_scale
    assert y.shape == (B, T, C)
    assert jnp.allclose(y, y_ref, rtol=1e-6, atol=1e-6)

    # bf16 input, C % 128 != 0 and total not a multiple of lcm(C, 128):
    # exercises the lane-dense zero-pad path, the 16-sublane rounding and the
    # f32-scale multiply with downcast at the store.
    B2, T2, C2 = 3, 5, 96
    x2 = jax.random.normal(k1, (B2, T2, C2), dtype=jnp.bfloat16)
    scale2 = jnp.ones((1, 1, C2), dtype=jnp.float32) * LAYER_SCALE_INIT
    y2 = jax.block_until_ready(layer_scale_forward(x2, scale2))
    y2_ref = (x2.astype(jnp.float32) * scale2).astype(jnp.bfloat16)
    assert y2.shape == (B2, T2, C2)
    assert jnp.allclose(
        y2.astype(jnp.float32), y2_ref.astype(jnp.float32), rtol=1e-2, atol=1e-6
    )

    print("KERNEL_OK")
</pallas_src>

<mosaic_0001>
module attributes {stable_mosaic.version = 11 : i64} {
  func.func @_layer_scale_kernel(%arg0: i32, %arg1: i32, %arg2: memref<4x128xf32, #tpu.memory_space<vmem>>, %arg3: memref<1x128xf32, #tpu.memory_space<vmem>>, %arg4: memref<4x128xf32, #tpu.memory_space<vmem>>) attributes {dimension_semantics = [#tpu.dimension_semantics<parallel>, #tpu.dimension_semantics<parallel>], iteration_bounds = array<i64: 1, 1>, scalar_prefetch = 0 : i64, scratch_operands = 0 : i64, tpu.core_type = #tpu.core_type<tc>, window_params = [{transform_indices = @transform_0, window_bounds = array<i64: 4, 128>}, {transform_indices = @transform_1, window_bounds = array<i64: 1, 128>}, {transform_indices = @transform_2, window_bounds = array<i64: 4, 128>}]} {
    %c0 = arith.constant 0 : index
    %c0_0 = arith.constant 0 : index
    %0 = vector.load %arg2[%c0, %c0_0] : memref<4x128xf32, #tpu.memory_space<vmem>>, vector<4x128xf32>
    %c0_1 = arith.constant 0 : index
    %c0_2 = arith.constant 0 : index
    %1 = vector.load %arg3[%c0_1, %c0_2] : memref<1x128xf32, #tpu.memory_space<vmem>>, vector<1x128xf32>
    %2 = vector.broadcast %1 : vector<1x128xf32> to vector<4x128xf32>
    %3 = arith.mulf %0, %2 : vector<4x128xf32>
    %c0_3 = arith.constant 0 : index
    %c0_4 = arith.constant 0 : index
    %4 = vector.load %arg4[%c0_3, %c0_4] : memref<4x128xf32, #tpu.memory_space<vmem>>, vector<4x128xf32>
    tpu.vector_store %arg4[%c0_3, %c0_4], %3 {strides = array<i32>} : memref<4x128xf32, #tpu.memory_space<vmem>>, vector<4x128xf32>,
    return
  }
  func.func @transform_0(%arg0: i32, %arg1: i32) -> (i32, i32) {
    %c0_i32 = arith.constant 0 : i32
    return %arg0, %arg1 : i32, i32
  }
  func.func @transform_1(%arg0: i32, %arg1: i32) -> (i32, i32) {
    %c0_i32 = arith.constant 0 : i32
    %c0_i32_0 = arith.constant 0 : i32
    return %c0_i32, %arg1 : i32, i32
  }
  func.func @transform_2(%arg0: i32, %arg1: i32) -> (i32, i32) {
    %c0_i32 = arith.constant 0 : i32
    return %arg0, %arg1 : i32, i32
  }
}

</mosaic_0001>

<llo_original>
// kernel: tpu_custom_call.1
$region0: #{tpu_custom_call.1}
  #allocation0 [shape = 'u32[]', space=smem, size = 0x4, offset = 0x4, fixed_abs, tag = 'smem constant byte address 0x4 - core index']
  #allocation1 [shape = 'u32[72,128]{1,0:T(1,128)}', space=vmem, size = 0x9000, scoped, tag = 'internal scratch']
  %s0 = inlined_call_operand.hbm [shape: f32[4,128], index: 0, kind: input, shape index: {}]
  %s1 = inlined_call_operand.hbm [shape: f32[1,128], index: 1, kind: input, shape index: {}]
  %s2 = inlined_call_operand.hbm [shape: f32[4,128], index: 2, kind: output, shape index: {}]
  %s3 = sld [smem:[#allocation0]]
  $region26: #{tpu_custom_call.1} parent=0
    _
  %s5 = ssub.s32 1, %s3
  %s6 = scalar_select 0, %s5, %s3
  $region1: #{tpu_custom_call.1} parent=0
    #allocation2 [shape = 'u8[2048]{0}', space=vmem, size = 0x800, scoped, tag = 'input window, operand 0, single buffered']
    #allocation3 [shape = 's32[1]{0}', space=sflag, size = 0x4, scoped, tag = 'scoped memory for tpu_custom_call.1']
    #allocation4 [shape = 's32[1]{0}', space=sflag, size = 0x4, scoped, tag = 'scoped memory for tpu_custom_call.1']
    #allocation5 [shape = 'u8[512]{0}', space=vmem, size = 0x400, scoped, tag = 'input window, operand 1, single buffered']
    #allocation6 [shape = 's32[1]{0}', space=sflag, size = 0x4, scoped, tag = 'scoped memory for tpu_custom_call.1']
    #allocation7 [shape = 'u8[2048]{0}', space=vmem, size = 0x800, scoped, tag = 'output window, operand 0, single buffered']
    %7 = vsyncpa [#allocation3], 0
    %8 = vsyncpa [#allocation6], 0
    %9 = vsyncpa [#allocation4], 0
    // Predicated region
    $region2: #{tpu_custom_call.1} parent=1 // pred_check
      _
    $region3: #{tpu_custom_call.1} parent=1 // pred_check_branch
      %11 = sbr.rel (0) target = $region5
    $region4: #{tpu_custom_call.1} parent=1 // pred_region
      %13 = vsyncadd [#allocation3], 0
      %s15 = sshll.u32 %s0, 4
      %s16 = int_to_ptr.hbm [resolvable:$true] %s15
      %s17 = sshll.u32 [#allocation2], 4
      %s18 = int_to_ptr.vmem [resolvable:$true] %s17
      %20 = dma.hbm_to_vmem [thread:$0]  %s16, 64, %s18, [#allocation3]
    $region5: #{tpu_custom_call.1} parent=1 // pred_fallthru
      _
    // Predicated region
    $region6: #{tpu_custom_call.1} parent=1 // pred_check
      _
    $region7: #{tpu_custom_call.1} parent=1 // pred_check_branch
      %22 = sbr.rel (0) target = $region9
    $region8: #{tpu_custom_call.1} parent=1 // pred_region
      %24 = vsyncadd [#allocation6], 0
      %s26 = sshll.u32 %s1, 4
      %s27 = int_to_ptr.hbm [resolvable:$true] %s26
      %s28 = sshll.u32 [#allocation5], 4
      %s29 = int_to_ptr.vmem [resolvable:$true] %s28
      %31 = dma.hbm_to_vmem [thread:$0]  %s27, 16, %s29, [#allocation6]
    $region9: #{tpu_custom_call.1} parent=1 // pred_fallthru
      _
    // Predicated region
    $region10: #{tpu_custom_call.1} parent=1 // pred_check
      _
    $region11: #{tpu_custom_call.1} parent=1 // pred_check_branch
      %33 = sbr.rel (0) target = $region13
    $region12: #{tpu_custom_call.1} parent=1 // pred_region
      %35 = dma.done [#allocation3], 64
    $region13: #{tpu_custom_call.1} parent=1 // pred_fallthru
      _
    // Predicated region
    $region14: #{tpu_custom_call.1} parent=1 // pred_check
      _
    $region15: #{tpu_custom_call.1} parent=1 // pred_check_branch
      %37 = sbr.rel (0) target = $region17
    $region16: #{tpu_custom_call.1} parent=1 // pred_region
      %39 = dma.done [#allocation6], 16
    $region17: #{tpu_custom_call.1} parent=1 // pred_fallthru
      _
    %v40 = vld [vmem:[#allocation2] sm:$0xf]
    %v41 = vld [vmem:[#allocation5] sm:$0x1]
    %v43 = vperm.slane %v41, 0
    %v45 = vmul.f32 %v40, %v43
    %46 = vst [vmem:[#allocation7] sm:$0xf] %v45
    // Predicated region
    $region18: #{tpu_custom_call.1} parent=1 // pred_check
      _
    $region19: #{tpu_custom_call.1} parent=1 // pred_check_branch
      %48 = sbr.rel (0) target = $region21
    $region20: #{tpu_custom_call.1} parent=1 // pred_region
      %50 = vsyncadd [#allocation4], 0
      %s52 = sshll.u32 [#allocation7], 4
      %s53 = int_to_ptr.vmem [resolvable:$true] %s52
      %s54 = sshll.u32 %s2, 4
      %s55 = int_to_ptr.hbm [resolvable:$true] %s54
      %57 = dma.vmem_to_hbm [thread:$0]  %s53, 64, %s55, [#allocation4]
    $region21: #{tpu_custom_call.1} parent=1 // pred_fallthru
      _
    // Predicated region
    $region22: #{tpu_custom_call.1} parent=1 // pred_check
      _
    $region23: #{tpu_custom_call.1} parent=1 // pred_check_branch
      %59 = sbr.rel (0) target = $region25
    $region24: #{tpu_custom_call.1} parent=1 // pred_region
      %61 = dma.done [#allocation4], 64
    $region25: #{tpu_custom_call.1} parent=1 // pred_fallthru
      _
    %62 = vsyncpa [#allocation3], 1
    %63 = vsyncpa [#allocation6], 1
    %64 = vsyncpa [#allocation4], 1

</llo_original>
